<compile_context>
chip_gen: v7x
topology: tpu7x:2x2x1
jax: 0.10.0
libtpu: 0.0.40
codegen_flags: <defaults>
</compile_context>

<pallas_src>
import functools

import jax
import jax.numpy as jnp
from jax import lax
from jax.experimental import pallas as pl
from jax.experimental.pallas import tpu as pltpu


def _round_up(v, m):
    return ((v + m - 1) // m) * m


def _largest_tile(padded, unit, max_tile):
    """Largest t = k*unit such that k divides (padded // unit) and t <= max_tile."""
    q = padded // unit
    kmax = max(1, min(q, max_tile // unit))
    best = 1
    for k in range(1, kmax + 1):
        if q % k == 0:
            best = k
    return best * unit


def _linear_kernel(tgt_ref, x_ref, w_ref, o_ref, acc_ref, *, tn):
    # tgt_ref: SMEM (2,) int32 -> [target, current_target], -1 == "no target"
    # x_ref:   VMEM (tm, tk) block of x                (batch, in)
    # w_ref:   VMEM (tn, tk) block of W (PyTorch (out, in) layout)
    # o_ref:   VMEM (tm, tn) block of the output
    # acc_ref: VMEM (tm, tn) f32 accumulator scratch
    n_idx = pl.program_id(0)
    k_idx = pl.program_id(2)

    @pl.when(k_idx == 0)
    def _init():
        acc_ref[...] = jnp.zeros_like(acc_ref)

    # out_block += x_block @ W_block.T, contracting directly on W's "in" dim —
    # no transposed copy of the weight tile is ever materialized.
    acc_ref[...] += lax.dot_general(
        x_ref[...],
        w_ref[...],
        dimension_numbers=(((1,), (1,)), ((), ())),
        preferred_element_type=jnp.float32,
    )

    @pl.when(k_idx == pl.num_programs(2) - 1)
    def _finalize():
        out = acc_ref[...]
        o_ref[...] = out.astype(o_ref.dtype)

        t0 = tgt_ref[0]
        t1 = tgt_ref[1]

        # Zero intervened output columns (out[:, target] = 0.0). Only runs when
        # an intervention target is actually set.
        @pl.when((t0 >= 0) | (t1 >= 0))
        def _mask():
            col = lax.broadcasted_iota(jnp.int32, out.shape, 1) + n_idx * tn
            mask = ((col == t0) & (t0 >= 0)) | ((col == t1) & (t1 >= 0))
            o_ref[...] = jnp.where(mask, 0.0, out).astype(o_ref.dtype)


@jax.jit
def _linear_forward_jit(x, weight, tgt):
    B, K = x.shape
    N = weight.shape[0]

    # Pad to lane/sublane-friendly shapes (lane-dense output -> unmasked vst).
    M_pad = _round_up(B, 8)
    N_pad = _round_up(N, 128)
    K_pad = _round_up(K, 128)

    # Tile sizes: multiples of 128 (lane) / 8 (sublane), capped so the
    # double-buffered working set stays a few MiB on every generation
    # (<< v5e's 16 MiB scoped default and v7x's 64 MiB physical VMEM).
    tm = _largest_tile(M_pad, 8, 256)
    tn = _largest_tile(N_pad, 128, 256)
    tk = _largest_tile(K_pad, 128, 512)

    x_p = x if (M_pad == B and K_pad == K) else jnp.pad(
        x, ((0, M_pad - B), (0, K_pad - K)))
    w_p = weight if (N_pad == N and K_pad == K) else jnp.pad(
        weight, ((0, N_pad - N), (0, K_pad - K)))

    grid = (N_pad // tn, M_pad // tm, K_pad // tk)

    grid_spec = pltpu.PrefetchScalarGridSpec(
        num_scalar_prefetch=1,
        grid=grid,
        in_specs=[
            pl.BlockSpec((tm, tk), lambda n, m, k, tgt_ref: (m, k)),
            pl.BlockSpec((tn, tk), lambda n, m, k, tgt_ref: (n, k)),
        ],
        out_specs=pl.BlockSpec((tm, tn), lambda n, m, k, tgt_ref: (m, n)),
        scratch_shapes=[pltpu.VMEM((tm, tn), jnp.float32)],
    )

    cost = pl.CostEstimate(
        flops=2 * M_pad * N_pad * K_pad,
        transcendentals=0,
        bytes_accessed=4 * (M_pad * K_pad + N_pad * K_pad + M_pad * N_pad),
    )

    out_p = pl.pallas_call(
        functools.partial(_linear_kernel, tn=tn),
        out_shape=jax.ShapeDtypeStruct((M_pad, N_pad), x.dtype),
        grid_spec=grid_spec,
        compiler_params=pltpu.CompilerParams(
            dimension_semantics=("parallel", "parallel", "arbitrary"),
        ),
        cost_estimate=cost,
    )(tgt, x_p, w_p)

    return out_p[:B, :N]


def linear_forward(x, weight, target=None, current_target=None):
    """Equivalent of Linear.forward(t, x, target) with time_invariant=True."""
    tgt = jnp.asarray(
        [-1 if target is None else int(target),
         -1 if current_target is None else int(current_target)],
        dtype=jnp.int32,
    )
    return _linear_forward_jit(x, weight, tgt)


if __name__ == "__main__":
    # Small, deterministic setup consistent with the module: n_inputs=32, batch=8.
    n_inputs = 32
    batch = 8

    key = jax.random.PRNGKey(0)
    kx, kw = jax.random.split(key)

    x = jax.random.normal(kx, (batch, n_inputs), dtype=jnp.float32)
    # nn.Linear(n_inputs, n_inputs, bias=False) weight: (out, in) layout,
    # deterministic uniform in [-1/sqrt(N), 1/sqrt(N)].
    bound = 1.0 / (n_inputs ** 0.5)
    weight = jax.random.uniform(
        kw, (n_inputs, n_inputs), dtype=jnp.float32, minval=-bound, maxval=bound
    )

    # forward(t, x) with no intervention (t unused since time_invariant=True)
    out = jax.block_until_ready(linear_forward(x, weight))
    # forward with target=3 (out[:, 3] == 0)
    out_tgt = jax.block_until_ready(linear_forward(x, weight, target=3))
    # forward with both target=3 and current_target=7
    out_both = jax.block_until_ready(
        linear_forward(x, weight, target=3, current_target=7))

    # correctness checks against plain JAX reference
    ref = x @ weight.T
    assert jnp.allclose(out, ref, atol=1e-5, rtol=1e-5)
    ref_tgt = ref.at[:, 3].set(0.0)
    assert jnp.allclose(out_tgt, ref_tgt, atol=1e-5, rtol=1e-5)
    ref_both = ref_tgt.at[:, 7].set(0.0)
    assert jnp.allclose(out_both, ref_both, atol=1e-5, rtol=1e-5)

    print("KERNEL_OK")
</pallas_src>

<mosaic_0001>
module attributes {stable_mosaic.version = 11 : i64} {
  func.func @_linear_kernel(%arg0: i32, %arg1: i32, %arg2: i32, %arg3: memref<2xi32, #tpu.memory_space<smem>>, %arg4: memref<8x128xf32, #tpu.memory_space<vmem>>, %arg5: memref<128x128xf32, #tpu.memory_space<vmem>>, %arg6: memref<8x128xf32, #tpu.memory_space<vmem>>, %arg7: memref<8x128xf32, #tpu.memory_space<vmem>>) attributes {dimension_semantics = [#tpu.dimension_semantics<parallel>, #tpu.dimension_semantics<parallel>, #tpu.dimension_semantics<arbitrary>], iteration_bounds = array<i64: 1, 1, 1>, scalar_prefetch = 1 : i64, scratch_operands = 1 : i64, tpu.core_type = #tpu.core_type<tc>, window_params = [{transform_indices = @transform_0, window_bounds = array<i64: 8, 128>}, {transform_indices = @transform_1, window_bounds = array<i64: 128, 128>}, {transform_indices = @transform_2, window_bounds = array<i64: 8, 128>}]} {
    %c0_i32 = arith.constant 0 : i32
    %0 = arith.cmpi eq, %arg2, %c0_i32 : i32
    %1 = arith.extui %0 : i1 to i32
    %c0_i32_0 = arith.constant 0 : i32
    %2 = arith.cmpi ne, %1, %c0_i32_0 : i32
    scf.if %2 {
      %cst_10 = arith.constant 0.000000e+00 : f32
      %12 = vector.broadcast %cst_10 : f32 to vector<8x128xf32>
      %c0_11 = arith.constant 0 : index
      %c0_12 = arith.constant 0 : index
      %13 = vector.load %arg7[%c0_11, %c0_12] : memref<8x128xf32, #tpu.memory_space<vmem>>, vector<8x128xf32>
      tpu.vector_store %arg7[%c0_11, %c0_12], %12 {strides = array<i32>} : memref<8x128xf32, #tpu.memory_space<vmem>>, vector<8x128xf32>,
    } else {
    }
    %c0 = arith.constant 0 : index
    %c0_1 = arith.constant 0 : index
    %3 = vector.load %arg7[%c0, %c0_1] : memref<8x128xf32, #tpu.memory_space<vmem>>, vector<8x128xf32>
    %c0_2 = arith.constant 0 : index
    %c0_3 = arith.constant 0 : index
    %4 = vector.load %arg4[%c0_2, %c0_3] : memref<8x128xf32, #tpu.memory_space<vmem>>, vector<8x128xf32>
    %c0_4 = arith.constant 0 : index
    %c0_5 = arith.constant 0 : index
    %5 = vector.load %arg5[%c0_4, %c0_5] : memref<128x128xf32, #tpu.memory_space<vmem>>, vector<128x128xf32>
    %cst = arith.constant dense<0.000000e+00> : vector<8x128xf32>
    %6 = tpu.matmul %4, %5, %cst {dimension_numbers = #tpu.dot_dimension_numbers<[1], [1], [0], [0], [0, 0, 1, 0], [], []>} : vector<8x128xf32>, vector<128x128xf32>, vector<8x128xf32> -> vector<8x128xf32>
    %7 = arith.addf %3, %6 : vector<8x128xf32>
    %c0_6 = arith.constant 0 : index
    %c0_7 = arith.constant 0 : index
    %8 = vector.load %arg7[%c0_6, %c0_7] : memref<8x128xf32, #tpu.memory_space<vmem>>, vector<8x128xf32>
    tpu.vector_store %arg7[%c0_6, %c0_7], %7 {strides = array<i32>} : memref<8x128xf32, #tpu.memory_space<vmem>>, vector<8x128xf32>,
    %c0_i32_8 = arith.constant 0 : i32
    %9 = arith.cmpi eq, %arg2, %c0_i32_8 : i32
    %10 = arith.extui %9 : i1 to i32
    %c0_i32_9 = arith.constant 0 : i32
    %11 = arith.cmpi ne, %10, %c0_i32_9 : i32
    scf.if %11 {
      %c0_10 = arith.constant 0 : index
      %c0_11 = arith.constant 0 : index
      %12 = vector.load %arg7[%c0_10, %c0_11] : memref<8x128xf32, #tpu.memory_space<vmem>>, vector<8x128xf32>
      %c0_12 = arith.constant 0 : index
      %c0_13 = arith.constant 0 : index
      %13 = vector.load %arg6[%c0_12, %c0_13] : memref<8x128xf32, #tpu.memory_space<vmem>>, vector<8x128xf32>
      tpu.vector_store %arg6[%c0_12, %c0_13], %12 {strides = array<i32>} : memref<8x128xf32, #tpu.memory_space<vmem>>, vector<8x128xf32>,
      %c0_14 = arith.constant 0 : index
      %14 = memref.load %arg3[%c0_14] : memref<2xi32, #tpu.memory_space<smem>>
      %c1 = arith.constant 1 : index
      %15 = memref.load %arg3[%c1] : memref<2xi32, #tpu.memory_space<smem>>
      %c0_i32_15 = arith.constant 0 : i32
      %16 = arith.cmpi sge, %14, %c0_i32_15 : i32
      %c0_i32_16 = arith.constant 0 : i32
      %17 = arith.cmpi sge, %15, %c0_i32_16 : i32
      %18 = arith.ori %16, %17 : i1
      %19 = arith.extui %18 : i1 to i32
      %c0_i32_17 = arith.constant 0 : i32
      %20 = arith.cmpi ne, %19, %c0_i32_17 : i32
      scf.if %20 {
        %21 = tpu.iota {dimensions = array<i32: 1>} : vector<8x128xi32>
        %c128_i32 = arith.constant 128 : i32
        %22 = arith.muli %arg0, %c128_i32 : i32
        %23 = vector.broadcast %22 : i32 to vector<8x128xi32>
        %24 = arith.addi %21, %23 : vector<8x128xi32>
        %25 = vector.broadcast %14 : i32 to vector<8x128xi32>
        %26 = arith.cmpi eq, %24, %25 : vector<8x128xi32>
        %c0_i32_18 = arith.constant 0 : i32
        %27 = arith.cmpi sge, %14, %c0_i32_18 : i32
        %28 = vector.broadcast %27 : i1 to vector<8x128xi1>
        %29 = arith.andi %26, %28 : vector<8x128xi1>
        %30 = vector.broadcast %15 : i32 to vector<8x128xi32>
        %31 = arith.cmpi eq, %24, %30 : vector<8x128xi32>
        %c0_i32_19 = arith.constant 0 : i32
        %32 = arith.cmpi sge, %15, %c0_i32_19 : i32
        %33 = vector.broadcast %32 : i1 to vector<8x128xi1>
        %34 = arith.andi %31, %33 : vector<8x128xi1>
        %35 = arith.ori %29, %34 : vector<8x128xi1>
        %cst_20 = arith.constant 0.000000e+00 : f32
        %36 = vector.broadcast %cst_20 : f32 to vector<8x128xf32>
        %37 = arith.select %35, %36, %12 : vector<8x128xi1>, vector<8x128xf32>
        %c0_21 = arith.constant 0 : index
        %c0_22 = arith.constant 0 : index
        %38 = vector.load %arg6[%c0_21, %c0_22] : memref<8x128xf32, #tpu.memory_space<vmem>>, vector<8x128xf32>
        tpu.vector_store %arg6[%c0_21, %c0_22], %37 {strides = array<i32>} : memref<8x128xf32, #tpu.memory_space<vmem>>, vector<8x128xf32>,
      } else {
      }
    } else {
    }
    return
  }
  func.func @transform_0(%arg0: i32, %arg1: i32, %arg2: i32, %arg3: memref<2xi32, #tpu.memory_space<smem>>) -> (i32, i32) {
    %c0_i32 = arith.constant 0 : i32
    return %arg1, %arg2 : i32, i32
  }
  func.func @transform_1(%arg0: i32, %arg1: i32, %arg2: i32, %arg3: memref<2xi32, #tpu.memory_space<smem>>) -> (i32, i32) {
    %c0_i32 = arith.constant 0 : i32
    return %arg0, %arg2 : i32, i32
  }
  func.func @transform_2(%arg0: i32, %arg1: i32, %arg2: i32, %arg3: memref<2xi32, #tpu.memory_space<smem>>) -> (i32, i32) {
    %c0_i32 = arith.constant 0 : i32
    return %arg1, %arg0 : i32, i32
  }
}

</mosaic_0001>

<llo_original>
// kernel: _linear_forward_jit.1
$region0: #{_linear_forward_jit.1}
  #allocation0 [shape = 'u32[]', space=smem, size = 0x4, offset = 0x4, fixed_abs, tag = 'smem constant byte address 0x4 - core index']
  #allocation1 [shape = 'u32[144,128]{1,0:T(1,128)}', space=vmem, size = 0x12000, scoped, tag = 'internal scratch']
  #allocation2 [shape = 'f32[8,128]{1,0:T(8,128)}', space=vmem, size = 0x1000, scoped, tag = 'scratch operand']
  #allocation3 [shape = 's32[1]{0}', space=sflag, size = 0x4, scoped, tag = 'scoped memory for _linear_forward_jit.1']
  #allocation4 [shape = 'u8[512]{0}', space=smem, size = 0x200, scoped, tag = 'prefetched SMEM operand 0']
  %s0 = inlined_call_operand.vmem [shape: s32[2], index: 0, kind: input, shape index: {}]
  %s1 = inlined_call_operand.vmem [shape: f32[8,128], index: 1, kind: input, shape index: {}]
  %s2 = inlined_call_operand.vmem [shape: f32[128,128], index: 2, kind: input, shape index: {}]
  %s3 = inlined_call_operand.hbm [shape: f32[8,128], index: 3, kind: output, shape index: {}]
  %s4 = sld [smem:[#allocation0]]
  $region30: #{_linear_forward_jit.1} parent=0
    _
  %s6 = ssub.s32 1, %s4
  %s7 = scalar_select 0, %s6, %s4
  %s8 = sshll.u32 %s0, 4
  %s9 = int_to_ptr.vmem [resolvable:$true] %s8
  %11 = dma.vmem_to_smem %s9, 16, [#allocation4], [#allocation3]
  %12 = dma.done [#allocation3], 16
  %13 = sfence
  $region1: #{_linear_forward_jit.1} parent=0
    #allocation5 [shape = 'u8[4096]{0}', space=vmem, size = 0x1000, scoped, tag = 'output window, operand 0, single buffered']
    #allocation6 [shape = 's32[1]{0}', space=sflag, size = 0x4, scoped, tag = 'scoped memory for _linear_forward_jit.1']
    %14 = vsyncpa [#allocation6], 0
    // Predicated region
    $region2: #{_linear_forward_jit.1} parent=1 // pred_check
      _
    $region3: #{_linear_forward_jit.1} parent=1 // pred_check_branch
      %16 = sbr.rel (0) target = $region5
    $region4: #{_linear_forward_jit.1} parent=1 // pred_region
      _
    $region5: #{_linear_forward_jit.1} parent=1 // pred_fallthru
      _
    // Predicated region
    $region6: #{_linear_forward_jit.1} parent=1 // pred_check
      _
    $region7: #{_linear_forward_jit.1} parent=1 // pred_check_branch
      %18 = sbr.rel (0) target = $region9
    $region8: #{_linear_forward_jit.1} parent=1 // pred_region
      _
    $region9: #{_linear_forward_jit.1} parent=1 // pred_fallthru
      _
    %p19 = scmp.eq.s32.totalorder 0, 0
    // Predicated region
    $region10: #{_linear_forward_jit.1} parent=1 // pred_check
      %p20 = pneg %p19
    $region11: #{_linear_forward_jit.1} parent=1 // pred_check_branch
      %22 = sbr.rel (%p20) target = $region13
    $region12: #{_linear_forward_jit.1} parent=1 // pred_region
      %23 = vst [vmem:[#allocation2] sm:$0xff] 0.0
    $region13: #{_linear_forward_jit.1} parent=1 // pred_fallthru
      _
    %v24 = vld [vmem:[#allocation2] sm:$0xff]
    %v25 = vld [vmem:[%s1] sm:$0xff]
    %v26 = vld [vmem:[%s2] sm:$0xff]
    %v27 = vld [vmem:[%s2 + $0x8] sm:$0xff]
    %v28 = vld [vmem:[%s2 + $0x10] sm:$0xff]
    %v29 = vld [vmem:[%s2 + $0x18] sm:$0xff]
    %v30 = vld [vmem:[%s2 + $0x20] sm:$0xff]
    %v31 = vld [vmem:[%s2 + $0x28] sm:$0xff]
    %v32 = vld [vmem:[%s2 + $0x30] sm:$0xff]
    %v33 = vld [vmem:[%s2 + $0x38] sm:$0xff]
    %v34 = vld [vmem:[%s2 + $0x40] sm:$0xff]
    %v35 = vld [vmem:[%s2 + $0x48] sm:$0xff]
    %v36 = vld [vmem:[%s2 + $0x50] sm:$0xff]
    %v37 = vld [vmem:[%s2 + $0x58] sm:$0xff]
    %v38 = vld [vmem:[%s2 + $0x60] sm:$0xff]
    %v39 = vld [vmem:[%s2 + $0x68] sm:$0xff]
    %v40 = vld [vmem:[%s2 + $0x70] sm:$0xff]
    %v41 = vld [vmem:[%s2 + $0x78] sm:$0xff]
    %42 = vmatprep.subr.mxu0 0.0
    %43 = vmatpush1.xpose.msra.mxu0 %v26
    %44 = vmatprep.subr.mxu0 0.0
    %45 = vmatpush1.xpose.msra.mxu0 %v27
    %46 = vmatprep.subr.mxu0 0.0
    %47 = vmatpush1.xpose.msra.mxu0 %v28
    %48 = vmatprep.subr.mxu0 0.0
    %49 = vmatpush1.xpose.msra.mxu0 %v29
    %50 = vmatprep.subr.mxu0 0.0
    %51 = vmatpush1.xpose.msra.mxu0 %v30
    %52 = vmatprep.subr.mxu0 0.0
    %53 = vmatpush1.xpose.msra.mxu0 %v31
    %54 = vmatprep.subr.mxu0 0.0
    %55 = vmatpush1.xpose.msra.mxu0 %v32
    %56 = vmatprep.subr.mxu0 0.0
    %57 = vmatpush1.xpose.msra.mxu0 %v33
    %58 = vmatprep.subr.mxu0 0.0
    %59 = vmatpush1.xpose.msra.mxu0 %v34
    %60 = vmatprep.subr.mxu0 0.0
    %61 = vmatpush1.xpose.msra.mxu0 %v35
    %62 = vmatprep.subr.mxu0 0.0
    %63 = vmatpush1.xpose.msra.mxu0 %v36
    %64 = vmatprep.subr.mxu0 0.0
    %65 = vmatpush1.xpose.msra.mxu0 %v37
    %66 = vmatprep.subr.mxu0 0.0
    %67 = vmatpush1.xpose.msra.mxu0 %v38
    %68 = vmatprep.subr.mxu0 0.0
    %69 = vmatpush1.xpose.msra.mxu0 %v39
    %70 = vmatprep.subr.mxu0 0.0
    %71 = vmatpush1.xpose.msra.mxu0 %v40
    %72 = vmatprep.subr.mxu0 0.0
    %73 = vmatpush1.xpose.msra.mxu0 %v41
    %74 = vmatprep.subr.mxu0 0.0
    %75 = vmatpush1.xpose.msra.mxu0 0.0
    %76 = vmatprep.subr.mxu0 0.0
    %77 = vmatpush1.xpose.msra.mxu0 0.0
    %78 = vmatprep.subr.mxu0 0.0
    %79 = vmatpush1.xpose.msra.mxu0 0.0
    %80 = vmatprep.subr.mxu0 0.0
    %81 = vmatpush1.xpose.msra.mxu0 0.0
    %82 = vmatprep.subr.mxu0 0.0
    %83 = vmatpush1.xpose.msra.mxu0 0.0
    %84 = vmatprep.subr.mxu0 0.0
    %85 = vmatpush1.xpose.msra.mxu0 0.0
    %86 = vmatprep.subr.mxu0 0.0
    %87 = vmatpush1.xpose.msra.mxu0 0.0
    %88 = vmatprep.subr.mxu0 0.0
    %89 = vmatpush1.xpose.msra.mxu0 0.0
    %90 = vmatprep.subr.mxu0 0.0
    %91 = vmatpush1.xpose.msra.mxu0 0.0
    %92 = vmatprep.subr.mxu0 0.0
    %93 = vmatpush1.xpose.msra.mxu0 0.0
    %94 = vmatprep.subr.mxu0 0.0
    %95 = vmatpush1.xpose.msra.mxu0 0.0
    %96 = vmatprep.subr.mxu0 0.0
    %97 = vmatpush1.xpose.msra.mxu0 0.0
    %98 = vmatprep.subr.mxu0 0.0
    %99 = vmatpush1.xpose.msra.mxu0 0.0
    %100 = vmatprep.subr.mxu0 0.0
    %101 = vmatpush1.xpose.msra.mxu0 0.0
    %102 = vmatprep.subr.mxu0 0.0
    %103 = vmatpush1.xpose.msra.mxu0 0.0
    %104 = vmatprep.subr.mxu0 0.0
    %105 = vmatpush1.xpose.msra.mxu0 0.0
    %106 = vmatprep.mubr.f32.mxu0 0.0
    %107 = vmatmul.mubr.f32.gmra.mrb[0].mxu0 %v25
    %v108 = vpop.f32.mrb[0].mxu0
    %v109 = vadd.f32 0.0, %v108
    %v110 = vpop.f32.mrb[0].mxu0
    %111 = vdwg.mxu0
    %v112 = vadd.f32 %v24, %v109
    %113 = vst [vmem:[#allocation2] sm:$0xff] %v112
    // Predicated region
    $region14: #{_linear_forward_jit.1} parent=1 // pred_check
      %p114 = pneg %p19
    $region15: #{_linear_forward_jit.1} parent=1 // pred_check_branch
      %116 = sbr.rel (%p114) target = $region17
    $region16: #{_linear_forward_jit.1} parent=1 // pred_region
      %v117 = vld [vmem:[#allocation2] sm:$0xff]
      %118 = vst [vmem:[#allocation5] sm:$0xff] %v117
      %s119 = sld [smem:[#allocation4]]
      %s120 = sld [smem:[#allocation4 + $0x1]]
      %p121 = scmp.ge.s32.totalorder %s119, 0
      %p122 = scmp.ge.s32.totalorder %s120, 0
      %p123 = por %p121, %p122
      // Predicated region
      $region18: #{_linear_forward_jit.1} parent=16 // pred_check
        %p124 = pneg %p123
      $region19: #{_linear_forward_jit.1} parent=16 // pred_check_branch
        %126 = sbr.rel (%p124) target = $region21
      $region20: #{_linear_forward_jit.1} parent=16 // pred_region
        %v127 = vlaneseq
        %v128 = vand.u32 %v127, 127
        %s129 = smul.u32 0, 128
        %v130 = vstv %s129
        %v131 = vadd.s32 %v128, %v130
        %v132 = vstv %s119
        %vm133 = vcmp.eq.s32.totalorder %v131, %v132
        %s134 = scalar_select %p121, 1, 0
        %v135 = vstv %s134
        %vm136 = vcmp.eq.s32.totalorder %v135, 1
        %vm137 = vmand %vm133, %vm136
        %v138 = vstv %s120
        %vm139 = vcmp.eq.s32.totalorder %v131, %v138
        %s140 = scalar_select %p122, 1, 0
        %v141 = vstv %s140
        %vm142 = vcmp.eq.s32.totalorder %v141, 1
        %vm143 = vmand %vm139, %vm142
        %vm144 = vmor %vm137, %vm143
        %v145 = vsel %vm144, 0.0, %v117
        %146 = vst [vmem:[#allocation5] sm:$0xff] %v145
      $region21: #{_linear_forward_jit.1} parent=16 // pred_fallthru
        _
    $region17: #{_linear_forward_jit.1} parent=1 // pred_fallthru
      _
    // Predicated region
    $region22: #{_linear_forward_jit.1} parent=1 // pred_check
      _
    $region23: #{_linear_forward_jit.1} parent=1 // pred_check_branch
      %148 = sbr.rel (0) target = $region25
    $region24: #{_linear_forward_jit.1} parent=1 // pred_region
      %s150 = ssub.s32 128, 128
      %151 = vsyncadd [#allocation6], %s150
      %s153 = sshll.u32 [#allocation5], 4
      %s154 = int_to_ptr.vmem [resolvable:$true] %s153
      %156 = dma.vmem_to_hbm [thread:$0]  %s154, 128, %s3, [#allocation6]
    $region25: #{_linear_forward_jit.1} parent=1 // pred_fallthru
      _
    // Predicated region
    $region26: #{_linear_forward_jit.1} parent=1 // pred_check
      _
    $region27: #{_linear_forward_jit.1} parent=1 // pred_check_branch
      %158 = sbr.rel (0) target = $region29
    $region28: #{_linear_forward_jit.1} parent=1 // pred_region
      %159 = dma.done [#allocation6], 128
    $region29: #{_linear_forward_jit.1} parent=1 // pred_fallthru
      _
    %160 = vsyncpa [#allocation6], 1

</llo_original>
